<compile_context>
chip_gen: v6e
topology: v6e:2x2x1
jax: 0.10.0
libtpu: 0.0.40
codegen_flags: <defaults>
</compile_context>

<pallas_src>
import functools

import jax
import jax.numpy as jnp
from jax.experimental import pallas as pl
from jax.experimental.pallas import tpu as pltpu

LANE = 128      # last-dim tiling granularity
SUBLANE = 16    # batch-tile granularity (covers bf16 packing: 16 rows / vreg)


def _round_up(x, m):
    return (x + m - 1) // m * m


def _mlp3_kernel(x_ref, w1_ref, b1_ref, w2_ref, b2_ref, w3_ref, b3_ref, o_ref):
    # layer1: (TB, in) @ (in, h1) -> f32 acc, f32 bias add
    h1 = jnp.dot(x_ref[...], w1_ref[...], preferred_element_type=jnp.float32)
    h1 = h1 + b1_ref[...]
    # layer2: back to compute dtype for the MXU, accumulate in f32
    h2 = jnp.dot(h1.astype(w2_ref.dtype), w2_ref[...],
                 preferred_element_type=jnp.float32)
    h2 = h2 + b2_ref[...]
    # layer3
    out = jnp.dot(h2.astype(w3_ref.dtype), w3_ref[...],
                  preferred_element_type=jnp.float32)
    out = out + b3_ref[...]
    o_ref[...] = out.astype(o_ref.dtype)


@functools.partial(jax.jit, static_argnames=("compute_dtype", "block_b"))
def simple_net_forward(x, w1, b1, w2, b2, w3, b3,
                       *, compute_dtype=jnp.bfloat16, block_b=256):
    """Fused forward pass of simpleNet.

    x:  (B, in_dim)            float32
    w1: (in_dim, h1)  b1: (h1,)
    w2: (h1, h2)      b2: (h2,)
    w3: (h2, out_dim) b3: (out_dim,)
    returns (B, out_dim) in x.dtype
    """
    B, in_dim = x.shape
    h1_dim = w1.shape[1]
    h2_dim = w2.shape[1]
    out_dim = w3.shape[1]
    out_dtype = x.dtype

    # --- pad feature dims to lane multiples, batch to a sublane-aligned tile ---
    in_p = _round_up(in_dim, LANE)
    h1_p = _round_up(h1_dim, LANE)
    h2_p = _round_up(h2_dim, LANE)
    out_p = _round_up(out_dim, LANE)

    tb = min(block_b, _round_up(B, SUBLANE))
    b_p = _round_up(B, tb)

    def pad2(a, rows, cols):
        return jnp.pad(a, ((0, rows - a.shape[0]), (0, cols - a.shape[1])))

    xp = pad2(x, b_p, in_p).astype(compute_dtype)
    w1p = pad2(w1, in_p, h1_p).astype(compute_dtype)
    w2p = pad2(w2, h1_p, h2_p).astype(compute_dtype)
    w3p = pad2(w3, h2_p, out_p).astype(compute_dtype)
    # Biases stay f32: the bias add happens on the f32 accumulator (VPU).
    b1p = pad2(b1.reshape(1, -1), 1, h1_p).astype(jnp.float32)
    b2p = pad2(b2.reshape(1, -1), 1, h2_p).astype(jnp.float32)
    b3p = pad2(b3.reshape(1, -1), 1, out_p).astype(jnp.float32)

    # --- VMEM budget: resident weights + double-buffered x/out + intermediates ---
    cbytes = jnp.dtype(compute_dtype).itemsize
    weight_bytes = (in_p * h1_p + h1_p * h2_p + h2_p * out_p) * cbytes
    bias_bytes = (h1_p + h2_p + out_p) * 4
    io_bytes = 2 * tb * (in_p * cbytes + out_p * 4)           # double-buffered
    interm_bytes = 2 * tb * max(h1_p, h2_p) * 4               # f32 intermediates
    vmem_limit = min(int(1.5 * (weight_bytes + bias_bytes + io_bytes
                                + interm_bytes)) + (4 << 20),
                     100 << 20)

    grid = (b_p // tb,)

    out_padded = pl.pallas_call(
        _mlp3_kernel,
        out_shape=jax.ShapeDtypeStruct((b_p, out_p), jnp.float32),
        grid=grid,
        in_specs=[
            pl.BlockSpec((tb, in_p), lambda i: (i, 0)),     # x: tiled over batch
            pl.BlockSpec((in_p, h1_p), lambda i: (0, 0)),   # weights/biases resident
            pl.BlockSpec((1, h1_p), lambda i: (0, 0)),
            pl.BlockSpec((h1_p, h2_p), lambda i: (0, 0)),
            pl.BlockSpec((1, h2_p), lambda i: (0, 0)),
            pl.BlockSpec((h2_p, out_p), lambda i: (0, 0)),
            pl.BlockSpec((1, out_p), lambda i: (0, 0)),
        ],
        out_specs=pl.BlockSpec((tb, out_p), lambda i: (i, 0)),
        compiler_params=pltpu.CompilerParams(
            dimension_semantics=("parallel",),
            vmem_limit_bytes=vmem_limit,
        ),
    )(xp, w1p, b1p, w2p, b2p, w3p, b3p)

    return out_padded[:B, :out_dim].astype(out_dtype)


def init_linear_params(key, in_features, out_features, dtype=jnp.float32):
    """PyTorch nn.Linear default init: U(-1/sqrt(in), 1/sqrt(in)).

    Weight is returned already transposed to (in_features, out_features).
    """
    kw, kb = jax.random.split(key)
    bound = 1.0 / (in_features ** 0.5)
    w = jax.random.uniform(kw, (in_features, out_features), dtype,
                           minval=-bound, maxval=bound)
    b = jax.random.uniform(kb, (out_features,), dtype,
                           minval=-bound, maxval=bound)
    return w, b


def _reference(x, w1, b1, w2, b2, w3, b3):
    return ((x @ w1 + b1) @ w2 + b2) @ w3 + b3


if __name__ == "__main__":
    key = jax.random.PRNGKey(0)

    # --- small shapes matching simpleNet(in_dim, n_hidden_1, n_hidden_2, out_dim) ---
    batch, in_dim, n_h1, n_h2, out_dim = 8, 32, 64, 48, 16
    kx, k1, k2, k3 = jax.random.split(key, 4)
    x = jax.random.normal(kx, (batch, in_dim), jnp.float32)
    w1, b1 = init_linear_params(k1, in_dim, n_h1)
    w2, b2 = init_linear_params(k2, n_h1, n_h2)
    w3, b3 = init_linear_params(k3, n_h2, out_dim)

    ref = _reference(x, w1, b1, w2, b2, w3, b3)

    # f32 compute path: strict check of semantics.
    out_f32 = jax.block_until_ready(
        simple_net_forward(x, w1, b1, w2, b2, w3, b3,
                           compute_dtype=jnp.float32))
    assert out_f32.shape == (batch, out_dim)
    assert jnp.allclose(out_f32, ref, atol=1e-4, rtol=1e-4)

    # bf16 MXU path (default, perf config): loose check vs f32 reference.
    out_bf16 = jax.block_until_ready(
        simple_net_forward(x, w1, b1, w2, b2, w3, b3))
    assert out_bf16.shape == (batch, out_dim)
    assert jnp.allclose(out_bf16, ref, atol=5e-2, rtol=5e-2)

    # --- larger shapes: exercise the batch grid (multiple steps) and padding ---
    batch2, in2, h1_2, h2_2, out2 = 512, 192, 320, 256, 96
    kx2, k4, k5, k6 = jax.random.split(jax.random.PRNGKey(1), 4)
    x2 = jax.random.normal(kx2, (batch2, in2), jnp.float32)
    W1, B1 = init_linear_params(k4, in2, h1_2)
    W2, B2 = init_linear_params(k5, h1_2, h2_2)
    W3, B3 = init_linear_params(k6, h2_2, out2)

    ref2 = _reference(x2, W1, B1, W2, B2, W3, B3)
    out2_bf16 = jax.block_until_ready(
        simple_net_forward(x2, W1, B1, W2, B2, W3, B3))
    assert out2_bf16.shape == (batch2, out2)
    assert jnp.allclose(out2_bf16, ref2, atol=2e-1, rtol=5e-2)

    print("KERNEL_OK")
</pallas_src>

<mosaic_0001>
module attributes {stable_mosaic.version = 11 : i64} {
  func.func @_mlp3_kernel(%arg0: i32, %arg1: memref<16x128xf32, #tpu.memory_space<vmem>>, %arg2: memref<128x128xf32, #tpu.memory_space<vmem>>, %arg3: memref<1x128xf32, #tpu.memory_space<vmem>>, %arg4: memref<128x128xf32, #tpu.memory_space<vmem>>, %arg5: memref<1x128xf32, #tpu.memory_space<vmem>>, %arg6: memref<128x128xf32, #tpu.memory_space<vmem>>, %arg7: memref<1x128xf32, #tpu.memory_space<vmem>>, %arg8: memref<16x128xf32, #tpu.memory_space<vmem>>) attributes {dimension_semantics = [#tpu.dimension_semantics<parallel>], iteration_bounds = array<i64: 1>, scalar_prefetch = 0 : i64, scratch_operands = 0 : i64, tpu.core_type = #tpu.core_type<tc>, window_params = [{transform_indices = @transform_0, window_bounds = array<i64: 16, 128>}, {pipeline_mode = #tpu.pipeline_mode<synchronous>, transform_indices = @transform_1, window_bounds = array<i64: 128, 128>}, {pipeline_mode = #tpu.pipeline_mode<synchronous>, transform_indices = @transform_2, window_bounds = array<i64: 1, 128>}, {pipeline_mode = #tpu.pipeline_mode<synchronous>, transform_indices = @transform_3, window_bounds = array<i64: 128, 128>}, {pipeline_mode = #tpu.pipeline_mode<synchronous>, transform_indices = @transform_4, window_bounds = array<i64: 1, 128>}, {pipeline_mode = #tpu.pipeline_mode<synchronous>, transform_indices = @transform_5, window_bounds = array<i64: 128, 128>}, {pipeline_mode = #tpu.pipeline_mode<synchronous>, transform_indices = @transform_6, window_bounds = array<i64: 1, 128>}, {transform_indices = @transform_7, window_bounds = array<i64: 16, 128>}]} {
    %c0 = arith.constant 0 : index
    %c0_0 = arith.constant 0 : index
    %0 = vector.load %arg1[%c0, %c0_0] : memref<16x128xf32, #tpu.memory_space<vmem>>, vector<16x128xf32>
    %c0_1 = arith.constant 0 : index
    %c0_2 = arith.constant 0 : index
    %1 = vector.load %arg2[%c0_1, %c0_2] : memref<128x128xf32, #tpu.memory_space<vmem>>, vector<128x128xf32>
    %cst = arith.constant dense<0.000000e+00> : vector<16x128xf32>
    %2 = tpu.matmul %0, %1, %cst {dimension_numbers = #tpu.dot_dimension_numbers<[1], [0], [0], [1], [0, 0, 1, 1], [], []>} : vector<16x128xf32>, vector<128x128xf32>, vector<16x128xf32> -> vector<16x128xf32>
    %c0_3 = arith.constant 0 : index
    %c0_4 = arith.constant 0 : index
    %3 = vector.load %arg3[%c0_3, %c0_4] : memref<1x128xf32, #tpu.memory_space<vmem>>, vector<1x128xf32>
    %4 = vector.broadcast %3 : vector<1x128xf32> to vector<16x128xf32>
    %5 = arith.addf %2, %4 : vector<16x128xf32>
    %c0_5 = arith.constant 0 : index
    %c0_6 = arith.constant 0 : index
    %6 = vector.load %arg4[%c0_5, %c0_6] : memref<128x128xf32, #tpu.memory_space<vmem>>, vector<128x128xf32>
    %cst_7 = arith.constant dense<0.000000e+00> : vector<16x128xf32>
    %7 = tpu.matmul %5, %6, %cst_7 {dimension_numbers = #tpu.dot_dimension_numbers<[1], [0], [0], [1], [0, 0, 1, 1], [], []>} : vector<16x128xf32>, vector<128x128xf32>, vector<16x128xf32> -> vector<16x128xf32>
    %c0_8 = arith.constant 0 : index
    %c0_9 = arith.constant 0 : index
    %8 = vector.load %arg5[%c0_8, %c0_9] : memref<1x128xf32, #tpu.memory_space<vmem>>, vector<1x128xf32>
    %9 = vector.broadcast %8 : vector<1x128xf32> to vector<16x128xf32>
    %10 = arith.addf %7, %9 : vector<16x128xf32>
    %c0_10 = arith.constant 0 : index
    %c0_11 = arith.constant 0 : index
    %11 = vector.load %arg6[%c0_10, %c0_11] : memref<128x128xf32, #tpu.memory_space<vmem>>, vector<128x128xf32>
    %cst_12 = arith.constant dense<0.000000e+00> : vector<16x128xf32>
    %12 = tpu.matmul %10, %11, %cst_12 {dimension_numbers = #tpu.dot_dimension_numbers<[1], [0], [0], [1], [0, 0, 1, 1], [], []>} : vector<16x128xf32>, vector<128x128xf32>, vector<16x128xf32> -> vector<16x128xf32>
    %c0_13 = arith.constant 0 : index
    %c0_14 = arith.constant 0 : index
    %13 = vector.load %arg7[%c0_13, %c0_14] : memref<1x128xf32, #tpu.memory_space<vmem>>, vector<1x128xf32>
    %14 = vector.broadcast %13 : vector<1x128xf32> to vector<16x128xf32>
    %15 = arith.addf %12, %14 : vector<16x128xf32>
    %c0_15 = arith.constant 0 : index
    %c0_16 = arith.constant 0 : index
    %16 = vector.load %arg8[%c0_15, %c0_16] : memref<16x128xf32, #tpu.memory_space<vmem>>, vector<16x128xf32>
    tpu.vector_store %arg8[%c0_15, %c0_16], %15 {strides = array<i32>} : memref<16x128xf32, #tpu.memory_space<vmem>>, vector<16x128xf32>,
    return
  }
  func.func @transform_0(%arg0: i32) -> (i32, i32) {
    %c0_i32 = arith.constant 0 : i32
    %c0_i32_0 = arith.constant 0 : i32
    return %arg0, %c0_i32 : i32, i32
  }
  func.func @transform_1(%arg0: i32) -> (i32, i32) {
    %c0_i32 = arith.constant 0 : i32
    %c0_i32_0 = arith.constant 0 : i32
    %c0_i32_1 = arith.constant 0 : i32
    return %c0_i32, %c0_i32_0 : i32, i32
  }
  func.func @transform_2(%arg0: i32) -> (i32, i32) {
    %c0_i32 = arith.constant 0 : i32
    %c0_i32_0 = arith.constant 0 : i32
    %c0_i32_1 = arith.constant 0 : i32
    return %c0_i32, %c0_i32_0 : i32, i32
  }
  func.func @transform_3(%arg0: i32) -> (i32, i32) {
    %c0_i32 = arith.constant 0 : i32
    %c0_i32_0 = arith.constant 0 : i32
    %c0_i32_1 = arith.constant 0 : i32
    return %c0_i32, %c0_i32_0 : i32, i32
  }
  func.func @transform_4(%arg0: i32) -> (i32, i32) {
    %c0_i32 = arith.constant 0 : i32
    %c0_i32_0 = arith.constant 0 : i32
    %c0_i32_1 = arith.constant 0 : i32
    return %c0_i32, %c0_i32_0 : i32, i32
  }
  func.func @transform_5(%arg0: i32) -> (i32, i32) {
    %c0_i32 = arith.constant 0 : i32
    %c0_i32_0 = arith.constant 0 : i32
    %c0_i32_1 = arith.constant 0 : i32
    return %c0_i32, %c0_i32_0 : i32, i32
  }
  func.func @transform_6(%arg0: i32) -> (i32, i32) {
    %c0_i32 = arith.constant 0 : i32
    %c0_i32_0 = arith.constant 0 : i32
    %c0_i32_1 = arith.constant 0 : i32
    return %c0_i32, %c0_i32_0 : i32, i32
  }
  func.func @transform_7(%arg0: i32) -> (i32, i32) {
    %c0_i32 = arith.constant 0 : i32
    %c0_i32_0 = arith.constant 0 : i32
    return %arg0, %c0_i32 : i32, i32
  }
}

</mosaic_0001>

<llo_original>
// kernel: simple_net_forward.1
$region0: #{simple_net_forward.1}
  #allocation0 [shape = 'u32[]', space=smem, size = 0x4, offset = 0x4, fixed_abs, tag = 'smem constant byte address 0x4 - core index']
  #allocation1 [shape = 'u32[144,128]{1,0:T(1,128)}', space=vmem, size = 0x12000, scoped, tag = 'internal scratch']
  %s0 = inlined_call_operand.vmem [shape: f32[16,128], index: 0, kind: input, shape index: {}]
  %s1 = inlined_call_operand.vmem [shape: f32[128,128], index: 1, kind: input, shape index: {}]
  %s2 = inlined_call_operand.vmem [shape: f32[1,128], index: 2, kind: input, shape index: {}]
  %s3 = inlined_call_operand.vmem [shape: f32[128,128], index: 3, kind: input, shape index: {}]
  %s4 = inlined_call_operand.vmem [shape: f32[1,128], index: 4, kind: input, shape index: {}]
  %s5 = inlined_call_operand.vmem [shape: f32[128,128], index: 5, kind: input, shape index: {}]
  %s6 = inlined_call_operand.vmem [shape: f32[1,128], index: 6, kind: input, shape index: {}]
  %s7 = inlined_call_operand.vmem [shape: f32[16,128], index: 7, kind: output, shape index: {}]
  %s8 = sld [smem:[#allocation0]]
  $region38: #{simple_net_forward.1} parent=0
    _
  %s10 = ssub.s32 1, %s8
  %s11 = scalar_select 0, %s10, %s8
  // Predicated region
  $region2: #{simple_net_forward.1} parent=0 // pred_check
    _
  $region3: #{simple_net_forward.1} parent=0 // pred_check_branch
    %13 = sbr.rel (0) target = $region5
  $region4: #{simple_net_forward.1} parent=0 // pred_region
    _
  $region5: #{simple_net_forward.1} parent=0 // pred_fallthru
    _
  // Predicated region
  $region6: #{simple_net_forward.1} parent=0 // pred_check
    _
  $region7: #{simple_net_forward.1} parent=0 // pred_check_branch
    %15 = sbr.rel (0) target = $region9
  $region8: #{simple_net_forward.1} parent=0 // pred_region
    _
  $region9: #{simple_net_forward.1} parent=0 // pred_fallthru
    _
  // Predicated region
  $region10: #{simple_net_forward.1} parent=0 // pred_check
    _
  $region11: #{simple_net_forward.1} parent=0 // pred_check_branch
    %17 = sbr.rel (0) target = $region13
  $region12: #{simple_net_forward.1} parent=0 // pred_region
    _
  $region13: #{simple_net_forward.1} parent=0 // pred_fallthru
    _
  // Predicated region
  $region14: #{simple_net_forward.1} parent=0 // pred_check
    _
  $region15: #{simple_net_forward.1} parent=0 // pred_check_branch
    %19 = sbr.rel (0) target = $region17
  $region16: #{simple_net_forward.1} parent=0 // pred_region
    _
  $region17: #{simple_net_forward.1} parent=0 // pred_fallthru
    _
  // Predicated region
  $region18: #{simple_net_forward.1} parent=0 // pred_check
    _
  $region19: #{simple_net_forward.1} parent=0 // pred_check_branch
    %21 = sbr.rel (0) target = $region21
  $region20: #{simple_net_forward.1} parent=0 // pred_region
    _
  $region21: #{simple_net_forward.1} parent=0 // pred_fallthru
    _
  // Predicated region
  $region22: #{simple_net_forward.1} parent=0 // pred_check
    _
  $region23: #{simple_net_forward.1} parent=0 // pred_check_branch
    %23 = sbr.rel (0) target = $region25
  $region24: #{simple_net_forward.1} parent=0 // pred_region
    _
  $region25: #{simple_net_forward.1} parent=0 // pred_fallthru
    _
  // Predicated region
  $region26: #{simple_net_forward.1} parent=0 // pred_check
    _
  $region27: #{simple_net_forward.1} parent=0 // pred_check_branch
    %25 = sbr.rel (0) target = $region29
  $region28: #{simple_net_forward.1} parent=0 // pred_region
    _
  $region29: #{simple_net_forward.1} parent=0 // pred_fallthru
    _
  %v26 = vld [vmem:[%s0] sm:$0xff]
  %v27 = vld [vmem:[%s0 + $0x8] sm:$0xff]
  %v28 = vld [vmem:[%s1] sm:$0xff]
  %v29 = vld [vmem:[%s1 + $0x8] sm:$0xff]
  %v30 = vld [vmem:[%s1 + $0x10] sm:$0xff]
  %v31 = vld [vmem:[%s1 + $0x18] sm:$0xff]
  %v32 = vld [vmem:[%s1 + $0x20] sm:$0xff]
  %v33 = vld [vmem:[%s1 + $0x28] sm:$0xff]
  %v34 = vld [vmem:[%s1 + $0x30] sm:$0xff]
  %v35 = vld [vmem:[%s1 + $0x38] sm:$0xff]
  %v36 = vld [vmem:[%s1 + $0x40] sm:$0xff]
  %v37 = vld [vmem:[%s1 + $0x48] sm:$0xff]
  %v38 = vld [vmem:[%s1 + $0x50] sm:$0xff]
  %v39 = vld [vmem:[%s1 + $0x58] sm:$0xff]
  %v40 = vld [vmem:[%s1 + $0x60] sm:$0xff]
  %v41 = vld [vmem:[%s1 + $0x68] sm:$0xff]
  %v42 = vld [vmem:[%s1 + $0x70] sm:$0xff]
  %v43 = vld [vmem:[%s1 + $0x78] sm:$0xff]
  %v44 = vld [vmem:[%s2] sm:$0x1]
  %v46 = vlaneseq
  %v47 = vshrl.u32 %v46, 7
  %v48 = vsub.s32 0, %v47
  %v49 = vrot.slane %v44, %v48
  %51 = vmatprep.subr.mxu0 0.0
  %52 = vmatpush1.msra.mxu0 %v43
  %53 = vmatprep.subr.mxu0 0.0
  %54 = vmatpush1.msra.mxu0 %v42
  %55 = vmatprep.subr.mxu0 0.0
  %56 = vmatpush1.msra.mxu0 %v41
  %57 = vmatprep.subr.mxu0 0.0
  %58 = vmatpush1.msra.mxu0 %v40
  %59 = vmatprep.subr.mxu0 0.0
  %60 = vmatpush1.msra.mxu0 %v39
  %61 = vmatprep.subr.mxu0 0.0
  %62 = vmatpush1.msra.mxu0 %v38
  %63 = vmatprep.subr.mxu0 0.0
  %64 = vmatpush1.msra.mxu0 %v37
  %65 = vmatprep.subr.mxu0 0.0
  %66 = vmatpush1.msra.mxu0 %v36
  %67 = vmatprep.subr.mxu0 0.0
  %68 = vmatpush1.msra.mxu0 %v35
  %69 = vmatprep.subr.mxu0 0.0
  %70 = vmatpush1.msra.mxu0 %v34
  %71 = vmatprep.subr.mxu0 0.0
  %72 = vmatpush1.msra.mxu0 %v33
  %73 = vmatprep.subr.mxu0 0.0
  %74 = vmatpush1.msra.mxu0 %v32
  %75 = vmatprep.subr.mxu0 0.0
  %76 = vmatpush1.msra.mxu0 %v31
  %77 = vmatprep.subr.mxu0 0.0
  %78 = vmatpush1.msra.mxu0 %v30
  %79 = vmatprep.subr.mxu0 0.0
  %80 = vmatpush1.msra.mxu0 %v29
  %81 = vmatprep.subr.mxu0 0.0
  %82 = vmatpush1.msra.mxu0 %v28
  %83 = vmatprep.subr.mxu0 0.0
  %84 = vmatpush2.msra.mxu0 0.0
  %85 = vmatprep.subr.mxu0 0.0
  %86 = vmatpush2.msra.mxu0 0.0
  %87 = vmatprep.subr.mxu0 0.0
  %88 = vmatpush2.msra.mxu0 0.0
  %89 = vmatprep.subr.mxu0 0.0
  %90 = vmatpush2.msra.mxu0 0.0
  %91 = vmatprep.subr.mxu0 0.0
  %92 = vmatpush2.msra.mxu0 0.0
  %93 = vmatprep.subr.mxu0 0.0
  %94 = vmatpush2.msra.mxu0 0.0
  %95 = vmatprep.subr.mxu0 0.0
  %96 = vmatpush2.msra.mxu0 0.0
  %97 = vmatprep.subr.mxu0 0.0
  %98 = vmatpush2.msra.mxu0 0.0
  %99 = vmatprep.subr.mxu0 0.0
  %100 = vmatpush2.msra.mxu0 0.0
  %101 = vmatprep.subr.mxu0 0.0
  %102 = vmatpush2.msra.mxu0 0.0
  %103 = vmatprep.subr.mxu0 0.0
  %104 = vmatpush2.msra.mxu0 0.0
  %105 = vmatprep.subr.mxu0 0.0
  %106 = vmatpush2.msra.mxu0 0.0
  %107 = vmatprep.subr.mxu0 0.0
  %108 = vmatpush2.msra.mxu0 0.0
  %109 = vmatprep.subr.mxu0 0.0
  %110 = vmatpush2.msra.mxu0 0.0
  %111 = vmatprep.subr.mxu0 0.0
  %112 = vmatpush2.msra.mxu0 0.0
  %113 = vmatprep.subr.mxu0 0.0
  %114 = vmatpush2.msra.mxu0 0.0
  %115 = vmatprep.mubr.f32.mxu0 0.0
  %116 = vmatmul.mubr.f32.gmra.mxu0 %v26
  %v117 = vpop.f32.mrf.mxu0
  %v118 = vadd.f32 %v49, %v117
  %v119 = vpop.f32.mrf.mxu0
  %120 = vmatprep.mubr.f32.mxu0 0.0
  %121 = vmatmul.mubr.f32.gmra.mxu0 %v27
  %v122 = vpop.f32.mrf.mxu0
  %v123 = vadd.f32 %v49, %v122
  %v124 = vpop.f32.mrf.mxu0
  %125 = vdwg.mxu0
  %v126 = vld [vmem:[%s3] sm:$0xff]
  %v127 = vld [vmem:[%s3 + $0x8] sm:$0xff]
  %v128 = vld [vmem:[%s3 + $0x10] sm:$0xff]
  %v129 = vld [vmem:[%s3 + $0x18] sm:$0xff]
  %v130 = vld [vmem:[%s3 + $0x20] sm:$0xff]
  %v131 = vld [vmem:[%s3 + $0x28] sm:$0xff]
  %v132 = vld [vmem:[%s3 + $0x30] sm:$0xff]
  %v133 = vld [vmem:[%s3 + $0x38] sm:$0xff]
  %v134 = vld [vmem:[%s3 + $0x40] sm:$0xff]
  %v135 = vld [vmem:[%s3 + $0x48] sm:$0xff]
  %v136 = vld [vmem:[%s3 + $0x50] sm:$0xff]
  %v137 = vld [vmem:[%s3 + $0x58] sm:$0xff]
  %v138 = vld [vmem:[%s3 + $0x60] sm:$0xff]
  %v139 = vld [vmem:[%s3 + $0x68] sm:$0xff]
  %v140 = vld [vmem:[%s3 + $0x70] sm:$0xff]
  %v141 = vld [vmem:[%s3 + $0x78] sm:$0xff]
  %v142 = vld [vmem:[%s4] sm:$0x1]
  %v144 = vlaneseq
  %v145 = vshrl.u32 %v144, 7
  %v146 = vsub.s32 0, %v145
  %v147 = vrot.slane %v142, %v146
  %149 = vmatprep.subr.mxu0 0.0
  %150 = vmatpush1.msra.mxu0 %v141
  %151 = vmatprep.subr.mxu0 0.0
  %152 = vmatpush1.msra.mxu0 %v140
  %153 = vmatprep.subr.mxu0 0.0
  %154 = vmatpush1.msra.mxu0 %v139
  %155 = vmatprep.subr.mxu0 0.0
  %156 = vmatpush1.msra.mxu0 %v138
  %157 = vmatprep.subr.mxu0 0.0
  %158 = vmatpush1.msra.mxu0 %v137
  %159 = vmatprep.subr.mxu0 0.0
  %160 = vmatpush1.msra.mxu0 %v136
  %161 = vmatprep.subr.mxu0 0.0
  %162 = vmatpush1.msra.mxu0 %v135
  %163 = vmatprep.subr.mxu0 0.0
  %164 = vmatpush1.msra.mxu0 %v134
  %165 = vmatprep.subr.mxu0 0.0
  %166 = vmatpush1.msra.mxu0 %v133
  %167 = vmatprep.subr.mxu0 0.0
  %168 = vmatpush1.msra.mxu0 %v132
  %169 = vmatprep.subr.mxu0 0.0
  %170 = vmatpush1.msra.mxu0 %v131
  %171 = vmatprep.subr.mxu0 0.0
  %172 = vmatpush1.msra.mxu0 %v130
  %173 = vmatprep.subr.mxu0 0.0
  %174 = vmatpush1.msra.mxu0 %v129
  %175 = vmatprep.subr.mxu0 0.0
  %176 = vmatpush1.msra.mxu0 %v128
  %177 = vmatprep.subr.mxu0 0.0
  %178 = vmatpush1.msra.mxu0 %v127
  %179 = vmatprep.subr.mxu0 0.0
  %180 = vmatpush1.msra.mxu0 %v126
  %181 = vmatprep.subr.mxu0 0.0
  %182 = vmatpush2.msra.mxu0 0.0
  %183 = vmatprep.subr.mxu0 0.0
  %184 = vmatpush2.msra.mxu0 0.0
  %185 = vmatprep.subr.mxu0 0.0
  %186 = vmatpush2.msra.mxu0 0.0
  %187 = vmatprep.subr.mxu0 0.0
  %188 = vmatpush2.msra.mxu0 0.0
  %189 = vmatprep.subr.mxu0 0.0
  %190 = vmatpush2.msra.mxu0 0.0
  %191 = vmatprep.subr.mxu0 0.0
  %192 = vmatpush2.msra.mxu0 0.0
  %193 = vmatprep.subr.mxu0 0.0
  %194 = vmatpush2.msra.mxu0 0.0
  %195 = vmatprep.subr.mxu0 0.0
  %196 = vmatpush2.msra.mxu0 0.0
  %197 = vmatprep.subr.mxu0 0.0
  %198 = vmatpush2.msra.mxu0 0.0
  %199 = vmatprep.subr.mxu0 0.0
  %200 = vmatpush2.msra.mxu0 0.0
  %201 = vmatprep.subr.mxu0 0.0
  %202 = vmatpush2.msra.mxu0 0.0
  %203 = vmatprep.subr.mxu0 0.0
  %204 = vmatpush2.msra.mxu0 0.0
  %205 = vmatprep.subr.mxu0 0.0
  %206 = vmatpush2.msra.mxu0 0.0
  %207 = vmatprep.subr.mxu0 0.0
  %208 = vmatpush2.msra.mxu0 0.0
  %209 = vmatprep.subr.mxu0 0.0
  %210 = vmatpush2.msra.mxu0 0.0
  %211 = vmatprep.subr.mxu0 0.0
  %212 = vmatpush2.msra.mxu0 0.0
  %213 = vmatprep.mubr.f32.mxu0 0.0
  %214 = vmatmul.mubr.f32.gmra.mxu0 %v118
  %v215 = vpop.f32.mrf.mxu0
  %v216 = vadd.f32 %v147, %v215
  %v217 = vpop.f32.mrf.mxu0
  %218 = vmatprep.mubr.f32.mxu0 0.0
  %219 = vmatmul.mubr.f32.gmra.mxu0 %v123
  %v220 = vpop.f32.mrf.mxu0
  %v221 = vadd.f32 %v147, %v220
  %v222 = vpop.f32.mrf.mxu0
  %223 = vdwg.mxu0
  %v224 = vld [vmem:[%s5] sm:$0xff]
  %v225 = vld [vmem:[%s5 + $0x8] sm:$0xff]
  %v226 = vld [vmem:[%s5 + $0x10] sm:$0xff]
  %v227 = vld [vmem:[%s5 + $0x18] sm:$0xff]
  %v228 = vld [vmem:[%s5 + $0x20] sm:$0xff]
  %v229 = vld [vmem:[%s5 + $0x28] sm:$0xff]
  %v230 = vld [vmem:[%s5 + $0x30] sm:$0xff]
  %v231 = vld [vmem:[%s5 + $0x38] sm:$0xff]
  %v232 = vld [vmem:[%s5 + $0x40] sm:$0xff]
  %v233 = vld [vmem:[%s5 + $0x48] sm:$0xff]
  %v234 = vld [vmem:[%s5 + $0x50] sm:$0xff]
  %v235 = vld [vmem:[%s5 + $0x58] sm:$0xff]
  %v236 = vld [vmem:[%s5 + $0x60] sm:$0xff]
  %v237 = vld [vmem:[%s5 + $0x68] sm:$0xff]
  %v238 = vld [vmem:[%s5 + $0x70] sm:$0xff]
  %v239 = vld [vmem:[%s5 + $0x78] sm:$0xff]
  %v240 = vld [vmem:[%s6] sm:$0x1]
  %v242 = vlaneseq
  %v243 = vshrl.u32 %v242, 7
  %v244 = vsub.s32 0, %v243
  %v245 = vrot.slane %v240, %v244
  %247 = vmatprep.subr.mxu0 0.0
  %248 = vmatpush1.msra.mxu0 %v239
  %249 = vmatprep.subr.mxu0 0.0
  %250 = vmatpush1.msra.mxu0 %v238
  %251 = vmatprep.subr.mxu0 0.0
  %252 = vmatpush1.msra.mxu0 %v237
  %253 = vmatprep.subr.mxu0 0.0
  %254 = vmatpush1.msra.mxu0 %v236
  %255 = vmatprep.subr.mxu0 0.0
  %256 = vmatpush1.msra.mxu0 %v235
  %257 = vmatprep.subr.mxu0 0.0
  %258 = vmatpush1.msra.mxu0 %v234
  %259 = vmatprep.subr.mxu0 0.0
  %260 = vmatpush1.msra.mxu0 %v233
  %261 = vmatprep.subr.mxu0 0.0
  %262 = vmatpush1.msra.mxu0 %v232
  %263 = vmatprep.subr.mxu0 0.0
  %264 = vmatpush1.msra.mxu0 %v231
  %265 = vmatprep.subr.mxu0 0.0
  %266 = vmatpush1.msra.mxu0 %v230
  %267 = vmatprep.subr.mxu0 0.0
  %268 = vmatpush1.msra.mxu0 %v229
  %269 = vmatprep.subr.mxu0 0.0
  %270 = vmatpush1.msra.mxu0 %v228
  %271 = vmatprep.subr.mxu0 0.0
  %272 = vmatpush1.msra.mxu0 %v227
  %273 = vmatprep.subr.mxu0 0.0
  %274 = vmatpush1.msra.mxu0 %v226
  %275 = vmatprep.subr.mxu0 0.0
  %276 = vmatpush1.msra.mxu0 %v225
  %277 = vmatprep.subr.mxu0 0.0
  %278 = vmatpush1.msra.mxu0 %v224
  %279 = vmatprep.subr.mxu0 0.0
  %280 = vmatpush2.msra.mxu0 0.0
  %281 = vmatprep.subr.mxu0 0.0
  %282 = vmatpush2.msra.mxu0 0.0
  %283 = vmatprep.subr.mxu0 0.0
  %284 = vmatpush2.msra.mxu0 0.0
  %285 = vmatprep.subr.mxu0 0.0
  %286 = vmatpush2.msra.mxu0 0.0
  %287 = vmatprep.subr.mxu0 0.0
  %288 = vmatpush2.msra.mxu0 0.0
  %289 = vmatprep.subr.mxu0 0.0
  %290 = vmatpush2.msra.mxu0 0.0
  %291 = vmatprep.subr.mxu0 0.0
  %292 = vmatpush2.msra.mxu0 0.0
  %293 = vmatprep.subr.mxu0 0.0
  %294 = vmatpush2.msra.mxu0 0.0
  %295 = vmatprep.subr.mxu0 0.0
  %296 = vmatpush2.msra.mxu0 0.0
  %297 = vmatprep.subr.mxu0 0.0
  %298 = vmatpush2.msra.mxu0 0.0
  %299 = vmatprep.subr.mxu0 0.0
  %300 = vmatpush2.msra.mxu0 0.0
  %301 = vmatprep.subr.mxu0 0.0
  %302 = vmatpush2.msra.mxu0 0.0
  %303 = vmatprep.subr.mxu0 0.0
  %304 = vmatpush2.msra.mxu0 0.0
  %305 = vmatprep.subr.mxu0 0.0
  %306 = vmatpush2.msra.mxu0 0.0
  %307 = vmatprep.subr.mxu0 0.0
  %308 = vmatpush2.msra.mxu0 0.0
  %309 = vmatprep.subr.mxu0 0.0
  %310 = vmatpush2.msra.mxu0 0.0
  %311 = vmatprep.mubr.f32.mxu0 0.0
  %312 = vmatmul.mubr.f32.gmra.mxu0 %v216
  %v313 = vpop.f32.mrf.mxu0
  %v314 = vadd.f32 %v245, %v313
  %v315 = vpop.f32.mrf.mxu0
  %316 = vmatprep.mubr.f32.mxu0 0.0
  %317 = vmatmul.mubr.f32.gmra.mxu0 %v221
  %v318 = vpop.f32.mrf.mxu0
  %v319 = vadd.f32 %v245, %v318
  %v320 = vpop.f32.mrf.mxu0
  %321 = vdwg.mxu0
  %322 = vst [vmem:[%s7] sm:$0xff] %v314
  %323 = vst [vmem:[%s7 + $0x8] sm:$0xff] %v319
  // Predicated region
  $region30: #{simple_net_forward.1} parent=0 // pred_check
    _
  $region31: #{simple_net_forward.1} parent=0 // pred_check_branch
    %325 = sbr.rel (0) target = $region33
  $region32: #{simple_net_forward.1} parent=0 // pred_region
    _
  $region33: #{simple_net_forward.1} parent=0 // pred_fallthru
    _
  // Predicated region
  $region34: #{simple_net_forward.1} parent=0 // pred_check
    _
  $region35: #{simple_net_forward.1} parent=0 // pred_check_branch
    %327 = sbr.rel (0) target = $region37
  $region36: #{simple_net_forward.1} parent=0 // pred_region
    _
  $region37: #{simple_net_forward.1} parent=0 // pred_fallthru
    _

</llo_original>
